<compile_context>
chip_gen: v6e
topology: v6e:2x2x1
jax: 0.10.0
libtpu: 0.0.40
codegen_flags: <defaults>
</compile_context>

<pallas_src>
import jax
import jax.numpy as jnp
from jax.experimental import pallas as pl
from jax.experimental.pallas import tpu as pltpu

EPS = 1e-5                    # nn.LayerNorm default
MATMUL_DTYPE = jnp.float32    # set to jnp.bfloat16 (f32 accumulate kept) for large D after
                              # validating tolerance; LN math stays f32.


def _normalizer_kernel(x_ref, ga_ref, ps_ref, w_ref, o_ref):
    x = x_ref[...]                                    # (BB, T, D) float32
    BB, T, D = x.shape
    n = float(T * D)

    # ---- global LayerNorm over the flattened (T*D) vector, per batch element ----
    # two single-axis reductions (lanes then sublanes); centered tensor reused
    mean_g = jnp.sum(jnp.sum(x, axis=2, keepdims=True), axis=1, keepdims=True) / n   # (BB,1,1)
    xc = x - mean_g
    var_g = jnp.sum(jnp.sum(xc * xc, axis=2, keepdims=True), axis=1, keepdims=True) / n
    xg = xc * jax.lax.rsqrt(var_g + EPS)

    ga = ga_ref[...]                                  # (2, T, D): [gamma; beta]
    xg = xg * ga[0] + ga[1]
    x1 = xg + x                                       # first residual, (BB, T, D)

    # ---- local LayerNorm over D ----
    mean_l = jnp.mean(x1, axis=2, keepdims=True)      # (BB, T, 1)
    xlc = x1 - mean_l
    var_l = jnp.mean(xlc * xlc, axis=2, keepdims=True)
    xl = xlc * jax.lax.rsqrt(var_l + EPS)

    ps = ps_ref[...]                                  # (8, D): [lgamma, lbeta, b1, b2, b3, pad..]
    xl = xl * ps[0:1] + ps[1:2]

    # ---- GatingUnit: batch block collapsed into the matmul M dimension ----
    # (free leading-dim reshape; one dot per projection instead of BB tiny ones)
    w = w_ref[...]                                    # (3, D, D): W1^T, W2^T, W3^T
    M = BB * T
    xl2 = xl.reshape(M, D).astype(MATMUL_DTYPE)
    u = jnp.dot(xl2, w[0], preferred_element_type=jnp.float32) + ps[2:3]
    u = u * jax.nn.sigmoid(u)                         # SiLU
    v = jnp.dot(xl2, w[1], preferred_element_type=jnp.float32) + ps[3:4]
    g = jnp.dot((u * v).astype(MATMUL_DTYPE), w[2],
                preferred_element_type=jnp.float32) + ps[4:5]

    # single full-block store (second residual).  For production D, pad D to a multiple
    # of 128 (or write a (BB, T*D) lane-dense slab) to avoid masked vst on 32/128 lanes.
    o_ref[...] = (g + x1.reshape(M, D)).reshape(BB, T, D).astype(o_ref.dtype)


def _pack_params(params, T, D):
    """One-time plain-JAX packing of torch-layout parameters into 3 slabs (fewer tiny DMAs)."""
    gg = params["norm_global_w"].reshape(T, D).astype(jnp.float32)
    gb = params["norm_global_b"].reshape(T, D).astype(jnp.float32)
    g_affine = jnp.stack([gg, gb])                                    # (2, T, D)

    z = jnp.zeros((D,), jnp.float32)
    p_small = jnp.stack([params["norm_local_w"], params["norm_local_b"],
                         params["b1"], params["b2"], params["b3"],
                         z, z, z]).astype(jnp.float32)                # (8, D)

    # torch Linear: y = x @ W^T + b  ->  pre-transpose once, outside the kernel.
    # Kept as three separate (D, D) mats (no fused (D, 2D)) since D % 128 != 0.
    w_slab = jnp.stack([params["w1"].T, params["w2"].T,
                        params["w3"].T]).astype(MATMUL_DTYPE)         # (3, D, D)
    return g_affine, p_small, w_slab


def normalizer_block(x, params, *, batch_block=None):
    """x: (B, T, D) float32. params: dict of NormalizerBlock parameters (torch layout)."""
    B, T, D = x.shape
    g_affine, p_small, w_slab = _pack_params(params, T, D)

    if batch_block is None:
        # Target <= ~1024 matmul rows and <= ~2 MiB of x per block (comfortable under the
        # v7x 64 MiB VMEM with double-buffered x/out), and pick a divisor of B so every
        # grid step is a full block.  For big B this yields a multi-step "parallel" grid
        # (DMA/compute overlap + both v7x TensorCores); for the toy shape it is one step.
        bb = max(1, min(B, 1024 // max(T, 1), (2 << 20) // max(T * D * 4, 1)))
        while B % bb:
            bb -= 1
        batch_block = bb
    BB = batch_block
    assert B % BB == 0, "batch_block must divide the batch size"
    grid = (B // BB,)

    # Explicit VMEM budget: double-buffered x/out blocks + resident param slabs + live f32
    # intermediates, with margin; clamped well under the v7x 64 MiB physical ceiling.
    f32b = 4
    blk = BB * T * D * f32b
    par = (2 * T * D + 8 * D + 3 * D * D) * f32b
    vmem_bytes = int(min(max(14 * blk + 2 * par, 4 << 20), 48 << 20))

    in_specs = [
        pl.BlockSpec((BB, T, D), lambda i: (i, 0, 0)),   # x (batch-row tile, pipelined)
        pl.BlockSpec((2, T, D), lambda i: (0, 0, 0)),    # global-LN gamma/beta slab
        pl.BlockSpec((8, D), lambda i: (0, 0)),          # local-LN gamma/beta + b1/b2/b3 slab
        pl.BlockSpec((3, D, D), lambda i: (0, 0, 0)),    # W1^T / W2^T / W3^T slab
    ]

    return pl.pallas_call(
        _normalizer_kernel,
        out_shape=jax.ShapeDtypeStruct((B, T, D), x.dtype),
        grid_spec=pl.GridSpec(
            grid=grid,
            in_specs=in_specs,
            out_specs=pl.BlockSpec((BB, T, D), lambda i: (i, 0, 0)),
        ),
        compiler_params=pltpu.CompilerParams(
            dimension_semantics=("parallel",),
            vmem_limit_bytes=vmem_bytes,
        ),
    )(x, g_affine, p_small, w_slab)


def _reference(x, params):
    """Pure-JAX reference matching the PyTorch NormalizerBlock forward."""
    B, T, D = x.shape
    hi = jax.lax.Precision.HIGHEST
    xf = x.reshape(B, T * D)
    m = xf.mean(axis=-1, keepdims=True)
    v = ((xf - m) ** 2).mean(axis=-1, keepdims=True)
    xf = (xf - m) / jnp.sqrt(v + EPS)
    xf = xf * params["norm_global_w"] + params["norm_global_b"]
    x1 = xf.reshape(B, T, D) + x
    m = x1.mean(axis=-1, keepdims=True)
    v = ((x1 - m) ** 2).mean(axis=-1, keepdims=True)
    xl = (x1 - m) / jnp.sqrt(v + EPS)
    xl = xl * params["norm_local_w"] + params["norm_local_b"]
    u = jnp.dot(xl, params["w1"].T, precision=hi) + params["b1"]
    u = u * jax.nn.sigmoid(u)
    vv = jnp.dot(xl, params["w2"].T, precision=hi) + params["b2"]
    g = jnp.dot(u * vv, params["w3"].T, precision=hi) + params["b3"]
    return g + x1


def init_params(key, d_model, num_tokens):
    ks = jax.random.split(key, 8)
    s = 1.0 / jnp.sqrt(d_model)
    return {
        "norm_global_w": 1.0 + 0.01 * jax.random.normal(ks[0], (d_model * num_tokens,), jnp.float32),
        "norm_global_b": 0.01 * jax.random.normal(ks[1], (d_model * num_tokens,), jnp.float32),
        "norm_local_w": 1.0 + 0.01 * jax.random.normal(ks[2], (d_model,), jnp.float32),
        "norm_local_b": 0.01 * jax.random.normal(ks[3], (d_model,), jnp.float32),
        # Linear layers (torch layout: (out, in))
        "w1": s * jax.random.normal(ks[4], (d_model, d_model), jnp.float32),
        "b1": s * jax.random.normal(ks[5], (d_model,), jnp.float32),
        "w2": s * jax.random.normal(ks[6], (d_model, d_model), jnp.float32),
        "b2": s * jax.random.normal(ks[7], (d_model,), jnp.float32),
        "w3": s * jax.random.normal(jax.random.fold_in(key, 100), (d_model, d_model), jnp.float32),
        "b3": s * jax.random.normal(jax.random.fold_in(key, 101), (d_model,), jnp.float32),
    }


if __name__ == "__main__":
    B, T, D = 2, 8, 32   # batch, num_tokens, d_model
    key = jax.random.PRNGKey(0)
    kx, kp = jax.random.split(key)
    x = jax.random.normal(kx, (B, T, D), jnp.float32)
    params = init_params(kp, D, T)

    out = normalizer_block(x, params)
    jax.block_until_ready(out)
    assert out.shape == (B, T, D)

    ref = _reference(x, params)
    max_err = float(jnp.max(jnp.abs(out - ref)))
    # Kernel dots use default MXU precision (reference uses HIGHEST); tolerance covers that.
    assert jnp.allclose(out, ref, atol=2e-2, rtol=2e-2), f"mismatch, max abs err {max_err}"
    print("KERNEL_OK")
</pallas_src>

<mosaic_0001>
module attributes {stable_mosaic.version = 11 : i64} {
  func.func @_normalizer_kernel(%arg0: i32, %arg1: memref<2x8x32xf32, #tpu.memory_space<vmem>>, %arg2: memref<2x8x32xf32, #tpu.memory_space<vmem>>, %arg3: memref<8x32xf32, #tpu.memory_space<vmem>>, %arg4: memref<3x32x32xf32, #tpu.memory_space<vmem>>, %arg5: memref<2x8x32xf32, #tpu.memory_space<vmem>>) attributes {dimension_semantics = [#tpu.dimension_semantics<parallel>], iteration_bounds = array<i64: 1>, scalar_prefetch = 0 : i64, scratch_operands = 0 : i64, tpu.core_type = #tpu.core_type<tc>, window_params = [{transform_indices = @transform_0, window_bounds = array<i64: 2, 8, 32>}, {pipeline_mode = #tpu.pipeline_mode<synchronous>, transform_indices = @transform_1, window_bounds = array<i64: 2, 8, 32>}, {pipeline_mode = #tpu.pipeline_mode<synchronous>, transform_indices = @transform_2, window_bounds = array<i64: 8, 32>}, {pipeline_mode = #tpu.pipeline_mode<synchronous>, transform_indices = @transform_3, window_bounds = array<i64: 3, 32, 32>}, {transform_indices = @transform_4, window_bounds = array<i64: 2, 8, 32>}]} {
    %c0 = arith.constant 0 : index
    %c0_0 = arith.constant 0 : index
    %c0_1 = arith.constant 0 : index
    %0 = vector.load %arg1[%c0, %c0_0, %c0_1] : memref<2x8x32xf32, #tpu.memory_space<vmem>>, vector<2x8x32xf32>
    %cst = arith.constant dense<0.000000e+00> : vector<2x8xf32>
    %1 = vector.multi_reduction <add>, %0, %cst [2] : vector<2x8x32xf32> to vector<2x8xf32>
    %2 = vector.shape_cast %1 : vector<2x8xf32> to vector<2x8x1xf32>
    %cst_2 = arith.constant dense<0.000000e+00> : vector<2x1xf32>
    %3 = vector.multi_reduction <add>, %2, %cst_2 [1] : vector<2x8x1xf32> to vector<2x1xf32>
    %4 = vector.shape_cast %3 : vector<2x1xf32> to vector<2x1x1xf32>
    %cst_3 = arith.constant 2.560000e+02 : f32
    %5 = vector.broadcast %cst_3 : f32 to vector<2x1x1xf32>
    %6 = arith.divf %4, %5 : vector<2x1x1xf32>
    %7 = vector.broadcast %6 : vector<2x1x1xf32> to vector<2x8x32xf32>
    %8 = arith.subf %0, %7 : vector<2x8x32xf32>
    %9 = arith.mulf %8, %8 : vector<2x8x32xf32>
    %cst_4 = arith.constant dense<0.000000e+00> : vector<2x8xf32>
    %10 = vector.multi_reduction <add>, %9, %cst_4 [2] : vector<2x8x32xf32> to vector<2x8xf32>
    %11 = vector.shape_cast %10 : vector<2x8xf32> to vector<2x8x1xf32>
    %cst_5 = arith.constant dense<0.000000e+00> : vector<2x1xf32>
    %12 = vector.multi_reduction <add>, %11, %cst_5 [1] : vector<2x8x1xf32> to vector<2x1xf32>
    %13 = vector.shape_cast %12 : vector<2x1xf32> to vector<2x1x1xf32>
    %cst_6 = arith.constant 2.560000e+02 : f32
    %14 = vector.broadcast %cst_6 : f32 to vector<2x1x1xf32>
    %15 = arith.divf %13, %14 : vector<2x1x1xf32>
    %cst_7 = arith.constant 9.99999974E-6 : f32
    %16 = vector.broadcast %cst_7 : f32 to vector<2x1x1xf32>
    %17 = arith.addf %15, %16 : vector<2x1x1xf32>
    %18 = math.rsqrt %17 : vector<2x1x1xf32>
    %19 = vector.broadcast %18 : vector<2x1x1xf32> to vector<2x8x32xf32>
    %20 = arith.mulf %8, %19 : vector<2x8x32xf32>
    %c0_8 = arith.constant 0 : index
    %c0_9 = arith.constant 0 : index
    %c0_10 = arith.constant 0 : index
    %21 = vector.load %arg2[%c0_8, %c0_9, %c0_10] : memref<2x8x32xf32, #tpu.memory_space<vmem>>, vector<2x8x32xf32>
    %22 = vector.extract_strided_slice %21 {offsets = [0, 0, 0], sizes = [1, 8, 32], strides = [1, 1, 1]} : vector<2x8x32xf32> to vector<1x8x32xf32>
    %23 = vector.shape_cast %22 : vector<1x8x32xf32> to vector<8x32xf32>
    %24 = vector.shape_cast %23 : vector<8x32xf32> to vector<1x8x32xf32>
    %25 = vector.broadcast %24 : vector<1x8x32xf32> to vector<2x8x32xf32>
    %26 = arith.mulf %20, %25 : vector<2x8x32xf32>
    %27 = vector.extract_strided_slice %21 {offsets = [1, 0, 0], sizes = [1, 8, 32], strides = [1, 1, 1]} : vector<2x8x32xf32> to vector<1x8x32xf32>
    %28 = vector.shape_cast %27 : vector<1x8x32xf32> to vector<8x32xf32>
    %29 = vector.shape_cast %28 : vector<8x32xf32> to vector<1x8x32xf32>
    %30 = vector.broadcast %29 : vector<1x8x32xf32> to vector<2x8x32xf32>
    %31 = arith.addf %26, %30 : vector<2x8x32xf32>
    %32 = arith.addf %31, %0 : vector<2x8x32xf32>
    %cst_11 = arith.constant dense<0.000000e+00> : vector<2x8xf32>
    %33 = vector.multi_reduction <add>, %32, %cst_11 [2] : vector<2x8x32xf32> to vector<2x8xf32>
    %34 = vector.shape_cast %33 : vector<2x8xf32> to vector<2x8x1xf32>
    %cst_12 = arith.constant 3.200000e+01 : f32
    %35 = vector.broadcast %cst_12 : f32 to vector<2x8x1xf32>
    %36 = arith.divf %34, %35 : vector<2x8x1xf32>
    %37 = vector.broadcast %36 : vector<2x8x1xf32> to vector<2x8x32xf32>
    %38 = arith.subf %32, %37 : vector<2x8x32xf32>
    %39 = arith.mulf %38, %38 : vector<2x8x32xf32>
    %cst_13 = arith.constant dense<0.000000e+00> : vector<2x8xf32>
    %40 = vector.multi_reduction <add>, %39, %cst_13 [2] : vector<2x8x32xf32> to vector<2x8xf32>
    %41 = vector.shape_cast %40 : vector<2x8xf32> to vector<2x8x1xf32>
    %cst_14 = arith.constant 3.200000e+01 : f32
    %42 = vector.broadcast %cst_14 : f32 to vector<2x8x1xf32>
    %43 = arith.divf %41, %42 : vector<2x8x1xf32>
    %cst_15 = arith.constant 9.99999974E-6 : f32
    %44 = vector.broadcast %cst_15 : f32 to vector<2x8x1xf32>
    %45 = arith.addf %43, %44 : vector<2x8x1xf32>
    %46 = math.rsqrt %45 : vector<2x8x1xf32>
    %47 = vector.broadcast %46 : vector<2x8x1xf32> to vector<2x8x32xf32>
    %48 = arith.mulf %38, %47 : vector<2x8x32xf32>
    %c0_16 = arith.constant 0 : index
    %c0_17 = arith.constant 0 : index
    %49 = vector.load %arg3[%c0_16, %c0_17] : memref<8x32xf32, #tpu.memory_space<vmem>>, vector<8x32xf32>
    %50 = vector.extract_strided_slice %49 {offsets = [0, 0], sizes = [1, 32], strides = [1, 1]} : vector<8x32xf32> to vector<1x32xf32>
    %51 = vector.shape_cast %50 : vector<1x32xf32> to vector<1x1x32xf32>
    %52 = vector.broadcast %51 : vector<1x1x32xf32> to vector<2x8x32xf32>
    %53 = arith.mulf %48, %52 : vector<2x8x32xf32>
    %54 = vector.extract_strided_slice %49 {offsets = [1, 0], sizes = [1, 32], strides = [1, 1]} : vector<8x32xf32> to vector<1x32xf32>
    %55 = vector.shape_cast %54 : vector<1x32xf32> to vector<1x1x32xf32>
    %56 = vector.broadcast %55 : vector<1x1x32xf32> to vector<2x8x32xf32>
    %57 = arith.addf %53, %56 : vector<2x8x32xf32>
    %c0_18 = arith.constant 0 : index
    %c0_19 = arith.constant 0 : index
    %c0_20 = arith.constant 0 : index
    %58 = vector.load %arg4[%c0_18, %c0_19, %c0_20] : memref<3x32x32xf32, #tpu.memory_space<vmem>>, vector<3x32x32xf32>
    %59 = vector.shape_cast %57 : vector<2x8x32xf32> to vector<16x32xf32>
    %60 = vector.extract_strided_slice %58 {offsets = [0, 0, 0], sizes = [1, 32, 32], strides = [1, 1, 1]} : vector<3x32x32xf32> to vector<1x32x32xf32>
    %61 = vector.shape_cast %60 : vector<1x32x32xf32> to vector<32x32xf32>
    %cst_21 = arith.constant dense<0.000000e+00> : vector<16x32xf32>
    %62 = tpu.matmul %59, %61, %cst_21 {dimension_numbers = #tpu.dot_dimension_numbers<[1], [0], [0], [1], [0, 0, 1, 1], [], []>} : vector<16x32xf32>, vector<32x32xf32>, vector<16x32xf32> -> vector<16x32xf32>
    %63 = vector.extract_strided_slice %49 {offsets = [2, 0], sizes = [1, 32], strides = [1, 1]} : vector<8x32xf32> to vector<1x32xf32>
    %64 = vector.broadcast %63 : vector<1x32xf32> to vector<16x32xf32>
    %65 = arith.addf %62, %64 : vector<16x32xf32>
    %66 = arith.negf %65 : vector<16x32xf32>
    %67 = math.exp %66 : vector<16x32xf32>
    %cst_22 = arith.constant 1.000000e+00 : f32
    %68 = vector.broadcast %cst_22 : f32 to vector<16x32xf32>
    %69 = arith.addf %68, %67 : vector<16x32xf32>
    %70 = arith.divf %68, %69 : vector<16x32xf32>
    %71 = arith.mulf %65, %70 : vector<16x32xf32>
    %72 = vector.extract_strided_slice %58 {offsets = [1, 0, 0], sizes = [1, 32, 32], strides = [1, 1, 1]} : vector<3x32x32xf32> to vector<1x32x32xf32>
    %73 = vector.shape_cast %72 : vector<1x32x32xf32> to vector<32x32xf32>
    %cst_23 = arith.constant dense<0.000000e+00> : vector<16x32xf32>
    %74 = tpu.matmul %59, %73, %cst_23 {dimension_numbers = #tpu.dot_dimension_numbers<[1], [0], [0], [1], [0, 0, 1, 1], [], []>} : vector<16x32xf32>, vector<32x32xf32>, vector<16x32xf32> -> vector<16x32xf32>
    %75 = vector.extract_strided_slice %49 {offsets = [3, 0], sizes = [1, 32], strides = [1, 1]} : vector<8x32xf32> to vector<1x32xf32>
    %76 = vector.broadcast %75 : vector<1x32xf32> to vector<16x32xf32>
    %77 = arith.addf %74, %76 : vector<16x32xf32>
    %78 = arith.mulf %71, %77 : vector<16x32xf32>
    %79 = vector.extract_strided_slice %58 {offsets = [2, 0, 0], sizes = [1, 32, 32], strides = [1, 1, 1]} : vector<3x32x32xf32> to vector<1x32x32xf32>
    %80 = vector.shape_cast %79 : vector<1x32x32xf32> to vector<32x32xf32>
    %cst_24 = arith.constant dense<0.000000e+00> : vector<16x32xf32>
    %81 = tpu.matmul %78, %80, %cst_24 {dimension_numbers = #tpu.dot_dimension_numbers<[1], [0], [0], [1], [0, 0, 1, 1], [], []>} : vector<16x32xf32>, vector<32x32xf32>, vector<16x32xf32> -> vector<16x32xf32>
    %82 = vector.extract_strided_slice %49 {offsets = [4, 0], sizes = [1, 32], strides = [1, 1]} : vector<8x32xf32> to vector<1x32xf32>
    %83 = vector.broadcast %82 : vector<1x32xf32> to vector<16x32xf32>
    %84 = arith.addf %81, %83 : vector<16x32xf32>
    %85 = vector.shape_cast %32 : vector<2x8x32xf32> to vector<16x32xf32>
    %86 = arith.addf %84, %85 : vector<16x32xf32>
    %87 = vector.shape_cast %86 : vector<16x32xf32> to vector<2x8x32xf32>
    %c0_25 = arith.constant 0 : index
    %c0_26 = arith.constant 0 : index
    %c0_27 = arith.constant 0 : index
    %88 = vector.load %arg5[%c0_25, %c0_26, %c0_27] : memref<2x8x32xf32, #tpu.memory_space<vmem>>, vector<2x8x32xf32>
    tpu.vector_store %arg5[%c0_25, %c0_26, %c0_27], %87 {strides = array<i32>} : memref<2x8x32xf32, #tpu.memory_space<vmem>>, vector<2x8x32xf32>,
    return
  }
  func.func @transform_0(%arg0: i32) -> (i32, i32, i32) {
    %c0_i32 = arith.constant 0 : i32
    %c0_i32_0 = arith.constant 0 : i32
    %c0_i32_1 = arith.constant 0 : i32
    return %arg0, %c0_i32, %c0_i32_0 : i32, i32, i32
  }
  func.func @transform_1(%arg0: i32) -> (i32, i32, i32) {
    %c0_i32 = arith.constant 0 : i32
    %c0_i32_0 = arith.constant 0 : i32
    %c0_i32_1 = arith.constant 0 : i32
    %c0_i32_2 = arith.constant 0 : i32
    return %c0_i32, %c0_i32_0, %c0_i32_1 : i32, i32, i32
  }
  func.func @transform_2(%arg0: i32) -> (i32, i32) {
    %c0_i32 = arith.constant 0 : i32
    %c0_i32_0 = arith.constant 0 : i32
    %c0_i32_1 = arith.constant 0 : i32
    return %c0_i32, %c0_i32_0 : i32, i32
  }
  func.func @transform_3(%arg0: i32) -> (i32, i32, i32) {
    %c0_i32 = arith.constant 0 : i32
    %c0_i32_0 = arith.constant 0 : i32
    %c0_i32_1 = arith.constant 0 : i32
    %c0_i32_2 = arith.constant 0 : i32
    return %c0_i32, %c0_i32_0, %c0_i32_1 : i32, i32, i32
  }
  func.func @transform_4(%arg0: i32) -> (i32, i32, i32) {
    %c0_i32 = arith.constant 0 : i32
    %c0_i32_0 = arith.constant 0 : i32
    %c0_i32_1 = arith.constant 0 : i32
    return %arg0, %c0_i32, %c0_i32_0 : i32, i32, i32
  }
}

</mosaic_0001>

<llo_original>
// kernel: tpu_custom_call.1
$region0: #{tpu_custom_call.1}
  #allocation0 [shape = 'u32[]', space=smem, size = 0x4, offset = 0x4, fixed_abs, tag = 'smem constant byte address 0x4 - core index']
  #allocation1 [shape = 'u32[144,128]{1,0:T(1,128)}', space=vmem, size = 0x12000, scoped, tag = 'internal scratch']
  %s0 = inlined_call_operand.hbm [shape: f32[2,8,32], index: 0, kind: input, shape index: {}]
  %s1 = inlined_call_operand.hbm [shape: f32[2,8,32], index: 1, kind: input, shape index: {}]
  %s2 = inlined_call_operand.hbm [shape: f32[8,32], index: 2, kind: input, shape index: {}]
  %s3 = inlined_call_operand.hbm [shape: f32[3,32,32], index: 3, kind: input, shape index: {}]
  %s4 = inlined_call_operand.hbm [shape: f32[2,8,32], index: 4, kind: output, shape index: {}]
  %s5 = sld [smem:[#allocation0]]
  $region42: #{tpu_custom_call.1} parent=0
    _
  %s7 = ssub.s32 1, %s5
  %s8 = scalar_select 0, %s7, %s5
  $region1: #{tpu_custom_call.1} parent=0
    #allocation2 [shape = 'u8[8192]{0}', space=vmem, size = 0x2000, scoped, tag = 'input window, operand 0, single buffered']
    #allocation3 [shape = 's32[1]{0}', space=sflag, size = 0x4, scoped, tag = 'scoped memory for tpu_custom_call.1']
    #allocation4 [shape = 's32[1]{0}', space=sflag, size = 0x4, scoped, tag = 'scoped memory for tpu_custom_call.1']
    #allocation5 [shape = 'u8[8192]{0}', space=vmem, size = 0x2000, scoped, tag = 'input window, operand 1, single buffered']
    #allocation6 [shape = 's32[1]{0}', space=sflag, size = 0x4, scoped, tag = 'scoped memory for tpu_custom_call.1']
    #allocation7 [shape = 'u8[4096]{0}', space=vmem, size = 0x1000, scoped, tag = 'input window, operand 2, single buffered']
    #allocation8 [shape = 'u8[49152]{0}', space=vmem, size = 0xc000, scoped, tag = 'input window, operand 3, single buffered']
    #allocation9 [shape = 's32[1]{0}', space=sflag, size = 0x4, scoped, tag = 'scoped memory for tpu_custom_call.1']
    #allocation10 [shape = 'u8[8192]{0}', space=vmem, size = 0x2000, scoped, tag = 'output window, operand 0, single buffered']
    %9 = vsyncpa [#allocation3], 0
    %10 = vsyncpa [#allocation6], 0
    %11 = vsyncpa [#allocation9], 0
    %12 = vsyncpa [#allocation4], 0
    // Predicated region
    $region2: #{tpu_custom_call.1} parent=1 // pred_check
      _
    $region3: #{tpu_custom_call.1} parent=1 // pred_check_branch
      %14 = sbr.rel (0) target = $region5
    $region4: #{tpu_custom_call.1} parent=1 // pred_region
      %s16 = ssub.s32 256, 256
      %17 = vsyncadd [#allocation3], %s16
      %s18 = sshll.u32 [#allocation2], 4
      %s19 = int_to_ptr.vmem [resolvable:$true] %s18
      %24 = dma.hbm_to_vmem [thread:$0]  %s0, 256, %s19, [#allocation3], 128, 128, 8
    $region5: #{tpu_custom_call.1} parent=1 // pred_fallthru
      _
    // Predicated region
    $region6: #{tpu_custom_call.1} parent=1 // pred_check
      _
    $region7: #{tpu_custom_call.1} parent=1 // pred_check_branch
      %26 = sbr.rel (0) target = $region9
    $region8: #{tpu_custom_call.1} parent=1 // pred_region
      %s28 = ssub.s32 256, 256
      %29 = vsyncadd [#allocation6], %s28
      %s30 = sshll.u32 [#allocation5], 4
      %s31 = int_to_ptr.vmem [resolvable:$true] %s30
      %36 = dma.hbm_to_vmem [thread:$0]  %s1, 256, %s31, [#allocation6], 128, 128, 8
    $region9: #{tpu_custom_call.1} parent=1 // pred_fallthru
      _
    // Predicated region
    $region10: #{tpu_custom_call.1} parent=1 // pred_check
      _
    $region11: #{tpu_custom_call.1} parent=1 // pred_check_branch
      %38 = sbr.rel (0) target = $region13
    $region12: #{tpu_custom_call.1} parent=1 // pred_region
      %s40 = ssub.s32 128, 128
      %41 = vsyncadd [#allocation6], %s40
      %s43 = sshll.u32 [#allocation7], 4
      %s44 = int_to_ptr.vmem [resolvable:$true] %s43
      %46 = dma.hbm_to_vmem [thread:$0]  %s2, 128, %s44, [#allocation6]
    $region13: #{tpu_custom_call.1} parent=1 // pred_fallthru
      _
    // Predicated region
    $region14: #{tpu_custom_call.1} parent=1 // pred_check
      _
    $region15: #{tpu_custom_call.1} parent=1 // pred_check_branch
      %48 = sbr.rel (0) target = $region17
    $region16: #{tpu_custom_call.1} parent=1 // pred_region
      %s50 = ssub.s32 1536, 1536
      %51 = vsyncadd [#allocation9], %s50
      %s52 = sshll.u32 [#allocation8], 4
      %s53 = int_to_ptr.vmem [resolvable:$true] %s52
      %58 = dma.hbm_to_vmem [thread:$0]  %s3, 1536, %s53, [#allocation9], 128, 128, 8
    $region17: #{tpu_custom_call.1} parent=1 // pred_fallthru
      _
    // Predicated region
    $region18: #{tpu_custom_call.1} parent=1 // pred_check
      _
    $region19: #{tpu_custom_call.1} parent=1 // pred_check_branch
      %60 = sbr.rel (0) target = $region21
    $region20: #{tpu_custom_call.1} parent=1 // pred_region
      %61 = dma.done [#allocation3], 256
    $region21: #{tpu_custom_call.1} parent=1 // pred_fallthru
      _
    // Predicated region
    $region22: #{tpu_custom_call.1} parent=1 // pred_check
      _
    $region23: #{tpu_custom_call.1} parent=1 // pred_check_branch
      %63 = sbr.rel (0) target = $region25
    $region24: #{tpu_custom_call.1} parent=1 // pred_region
      %64 = dma.done [#allocation6], 256
    $region25: #{tpu_custom_call.1} parent=1 // pred_fallthru
      _
    // Predicated region
    $region26: #{tpu_custom_call.1} parent=1 // pred_check
      _
    $region27: #{tpu_custom_call.1} parent=1 // pred_check_branch
      %66 = sbr.rel (0) target = $region29
    $region28: #{tpu_custom_call.1} parent=1 // pred_region
      %67 = dma.done [#allocation6], 128
    $region29: #{tpu_custom_call.1} parent=1 // pred_fallthru
      _
    // Predicated region
    $region30: #{tpu_custom_call.1} parent=1 // pred_check
      _
    $region31: #{tpu_custom_call.1} parent=1 // pred_check_branch
      %69 = sbr.rel (0) target = $region33
    $region32: #{tpu_custom_call.1} parent=1 // pred_region
      %70 = dma.done [#allocation9], 1536
    $region33: #{tpu_custom_call.1} parent=1 // pred_fallthru
      _
    %v71 = vld [vmem:[#allocation2] sm:$0xff]
    %v72 = vld [vmem:[#allocation2 + $0x8] sm:$0xff]
    %vm73 = vcmask 261120
    %v74 = vsel %vm73, %v71, 0.0
    %75 = vadd.xlane.f32.xlu0 %v74
    %v76 = vpop.xlane.xlu0 %75
    %v77 = vsel %vm73, %v72, 0.0
    %78 = vadd.xlane.f32.xlu0 %v77
    %v79 = vpop.xlane.xlu0 %78
    %v80 = vrot.slane %v76, 4
    %v81 = vadd.f32 %v76, %v80
    %v82 = vrot.slane %v81, 2
    %v83 = vadd.f32 %v81, %v82
    %v84 = vrot.slane %v83, 1
    %v85 = vadd.f32 %v83, %v84
    %v86 = vrot.slane %v79, 4
    %v87 = vadd.f32 %v79, %v86
    %v88 = vrot.slane %v87, 2
    %v89 = vadd.f32 %v87, %v88
    %v90 = vrot.slane %v89, 1
    %v91 = vadd.f32 %v89, %v90
    %v92 = vrcp.pop 256.0
    %v93 = vmul.f32 %v85, %v92
    %v94 = vmul.f32 %v91, %v92
    %v95 = vsub.f32 %v71, %v93
    %v96 = vsub.f32 %v72, %v94
    %v97 = vmul.f32 %v95, %v95
    %v98 = vmul.f32 %v96, %v96
    %v99 = vsel %vm73, %v97, 0.0
    %100 = vadd.xlane.f32.xlu0 %v99
    %v101 = vpop.xlane.xlu0 %100
    %v102 = vsel %vm73, %v98, 0.0
    %103 = vadd.xlane.f32.xlu0 %v102
    %v104 = vpop.xlane.xlu0 %103
    %v105 = vrot.slane %v101, 4
    %v106 = vadd.f32 %v101, %v105
    %v107 = vrot.slane %v106, 2
    %v108 = vadd.f32 %v106, %v107
    %v109 = vrot.slane %v108, 1
    %v110 = vadd.f32 %v108, %v109
    %v111 = vrot.slane %v104, 4
    %v112 = vadd.f32 %v104, %v111
    %v113 = vrot.slane %v112, 2
    %v114 = vadd.f32 %v112, %v113
    %v115 = vrot.slane %v114, 1
    %v116 = vadd.f32 %v114, %v115
    %v117 = vmul.f32 %v110, %v92
    %v118 = vmul.f32 %v116, %v92
    %v119 = vadd.f32 %v117, 1e-05
    %v120 = vadd.f32 %v118, 1e-05
    %v121 = vrsqrt.pop %v119
    %v122 = vrsqrt.pop %v120
    %v123 = vmul.f32 %v95, %v121
    %v124 = vmul.f32 %v96, %v122
    %v125 = vld [vmem:[#allocation5] sm:$0xff]
    %v126 = vld [vmem:[#allocation5 + $0x8] sm:$0xff]
    %v127 = vmul.f32 %v123, %v125
    %v128 = vmul.f32 %v124, %v125
    %v129 = vadd.f32 %v127, %v126
    %v130 = vadd.f32 %v128, %v126
    %v131 = vadd.f32 %v129, %v71
    %v132 = vadd.f32 %v130, %v72
    %v133 = vsel %vm73, %v131, 0.0
    %134 = vadd.xlane.f32.xlu0 %v133
    %v135 = vpop.xlane.xlu0 %134
    %v136 = vsel %vm73, %v132, 0.0
    %137 = vadd.xlane.f32.xlu0 %v136
    %v138 = vpop.xlane.xlu0 %137
    %v139 = vrcp.pop 32.0
    %v140 = vmul.f32 %v135, %v139
    %v141 = vmul.f32 %v138, %v139
    %v142 = vsub.f32 %v131, %v140
    %v143 = vsub.f32 %v132, %v141
    %v144 = vmul.f32 %v142, %v142
    %v145 = vmul.f32 %v143, %v143
    %v146 = vsel %vm73, %v144, 0.0
    %147 = vadd.xlane.f32.xlu0 %v146
    %v148 = vpop.xlane.xlu0 %147
    %v149 = vsel %vm73, %v145, 0.0
    %150 = vadd.xlane.f32.xlu0 %v149
    %v151 = vpop.xlane.xlu0 %150
    %v152 = vmul.f32 %v148, %v139
    %v153 = vmul.f32 %v151, %v139
    %v154 = vadd.f32 %v152, 1e-05
    %v155 = vadd.f32 %v153, 1e-05
    %v156 = vrsqrt.pop %v154
    %v157 = vrsqrt.pop %v155
    %v158 = vmul.f32 %v142, %v156
    %v159 = vmul.f32 %v143, %v157
    %v160 = vld [vmem:[#allocation7] sm:$0xff]
    %v161 = vlaneseq
    %v162 = vshrl.u32 %v161, 7
    %v163 = vsub.s32 0, %v162
    %v164 = vrot.slane %v160, %v163
    %v165 = vmul.f32 %v158, %v164
    %v166 = vmul.f32 %v159, %v164
    %v167 = vlaneseq
    %v168 = vshrl.u32 %v167, 7
    %v169 = vsub.s32 1, %v168
    %v170 = vrot.slane %v160, %v169
    %v171 = vadd.f32 %v165, %v170
    %v172 = vadd.f32 %v166, %v170
    %v173 = vld [vmem:[#allocation8] sm:$0xff]
    %v174 = vld [vmem:[#allocation8 + $0x8] sm:$0xff]
    %v175 = vld [vmem:[#allocation8 + $0x10] sm:$0xff]
    %v176 = vld [vmem:[#allocation8 + $0x18] sm:$0xff]
    %v177 = vld [vmem:[#allocation8 + $0x20] sm:$0xff]
    %v178 = vld [vmem:[#allocation8 + $0x28] sm:$0xff]
    %v179 = vld [vmem:[#allocation8 + $0x30] sm:$0xff]
    %v180 = vld [vmem:[#allocation8 + $0x38] sm:$0xff]
    %v181 = vld [vmem:[#allocation8 + $0x40] sm:$0xff]
    %v182 = vld [vmem:[#allocation8 + $0x48] sm:$0xff]
    %v183 = vld [vmem:[#allocation8 + $0x50] sm:$0xff]
    %v184 = vld [vmem:[#allocation8 + $0x58] sm:$0xff]
    %v185 = vlaneseq
    %v186 = vshrl.u32 %v185, 7
    %v187 = vsub.s32 2, %v186
    %v188 = vrot.slane %v160, %v187
    %v190 = vsel %vm73, %v171, 0
    %v193 = vsel %vm73, %v172, 0
    %195 = vmatprep.subr.mxu0 0.0
    %196 = vmatpush1.msra.mxu0 0.0
    %197 = vmatprep.subr.mxu0 0.0
    %198 = vmatpush1.msra.mxu0 0.0
    %199 = vmatprep.subr.mxu0 0.0
    %200 = vmatpush1.msra.mxu0 0.0
    %201 = vmatprep.subr.mxu0 0.0
    %202 = vmatpush1.msra.mxu0 0.0
    %203 = vmatprep.subr.mxu0 0.0
    %204 = vmatpush1.msra.mxu0 0.0
    %205 = vmatprep.subr.mxu0 0.0
    %206 = vmatpush1.msra.mxu0 0.0
    %207 = vmatprep.subr.mxu0 0.0
    %208 = vmatpush1.msra.mxu0 0.0
    %209 = vmatprep.subr.mxu0 0.0
    %210 = vmatpush1.msra.mxu0 0.0
    %211 = vmatprep.subr.mxu0 0.0
    %212 = vmatpush1.msra.mxu0 0.0
    %213 = vmatprep.subr.mxu0 0.0
    %214 = vmatpush1.msra.mxu0 0.0
    %215 = vmatprep.subr.mxu0 0.0
    %216 = vmatpush1.msra.mxu0 0.0
    %217 = vmatprep.subr.mxu0 0.0
    %218 = vmatpush1.msra.mxu0 0.0
    %219 = vmatprep.subr.mxu0 0.0
    %220 = vmatpush1.msra.mxu0 %v176
    %221 = vmatprep.subr.mxu0 0.0
    %222 = vmatpush1.msra.mxu0 %v175
    %223 = vmatprep.subr.mxu0 0.0
    %224 = vmatpush1.msra.mxu0 %v174
    %225 = vmatprep.subr.mxu0 0.0
    %226 = vmatpush1.msra.mxu0 %v173
    %227 = vmatprep.subr.mxu0 0.0
    %228 = vmatpush2.msra.mxu0 0.0
    %229 = vmatprep.subr.mxu0 0.0
    %230 = vmatpush2.msra.mxu0 0.0
    %231 = vmatprep.subr.mxu0 0.0
    %232 = vmatpush2.msra.mxu0 0.0
    %233 = vmatprep.subr.mxu0 0.0
    %234 = vmatpush2.msra.mxu0 0.0
    %235 = vmatprep.subr.mxu0 0.0
    %236 = vmatpush2.msra.mxu0 0.0
    %237 = vmatprep.subr.mxu0 0.0
    %238 = vmatpush2.msra.mxu0 0.0
    %239 = vmatprep.subr.mxu0 0.0
    %240 = vmatpush2.msra.mxu0 0.0
    %241 = vmatprep.subr.mxu0 0.0
    %242 = vmatpush2.msra.mxu0 0.0
    %243 = vmatprep.subr.mxu0 0.0
    %244 = vmatpush2.msra.mxu0 0.0
    %245 = vmatprep.subr.mxu0 0.0
    %246 = vmatpush2.msra.mxu0 0.0
    %247 = vmatprep.subr.mxu0 0.0
    %248 = vmatpush2.msra.mxu0 0.0
    %249 = vmatprep.subr.mxu0 0.0
    %250 = vmatpush2.msra.mxu0 0.0
    %251 = vmatprep.subr.mxu0 0.0
    %252 = vmatpush2.msra.mxu0 0.0
    %253 = vmatprep.subr.mxu0 0.0
    %254 = vmatpush2.msra.mxu0 0.0
    %255 = vmatprep.subr.mxu0 0.0
    %256 = vmatpush2.msra.mxu0 0.0
    %257 = vmatprep.subr.mxu0 0.0
    %258 = vmatpush2.msra.mxu0 0.0
    %259 = vmatprep.mubr.f32.mxu0 0.0
    %260 = vmatmul.mubr.f32.gmra.mxu0 %v190
    %v261 = vpop.f32.mrf.mxu0
    %v262 = vadd.f32 %v188, %v261
    %v263 = vpop.f32.mrf.mxu0
    %264 = vmatprep.mubr.f32.mxu0 0.0
    %265 = vmatmul.mubr.f32.gmra.mxu0 %v193
    %v266 = vpop.f32.mrf.mxu0
    %v267 = vadd.f32 %v188, %v266
    %v268 = vpop.f32.mrf.mxu0
    %269 = vdwg.mxu0
    %v270 = vxor.u32 %v262, 2147483648
    %v271 = vxor.u32 %v267, 2147483648
    %v272 = vmul.f32 %v270, 1.442695
    %v273 = vpow.pop %v272
    %v274 = vmul.f32 %v271, 1.442695
    %v275 = vpow.pop %v274
    %v276 = vadd.f32 %v273, 1.0
    %v277 = vadd.f32 %v275, 1.0
    %v278 = vrcp.pop %v276
    %v279 = vmul.f32 1.0, %v278
    %v280 = vrcp.pop %v277
    %v281 = vmul.f32 1.0, %v280
    %v282 = vmul.f32 %v262, %v279
    %v283 = vmul.f32 %v267, %v281
    %v284 = vlaneseq
    %v285 = vshrl.u32 %v284, 7
    %v286 = vsub.s32 3, %v285
    %v287 = vrot.slane %v160, %v286
    %288 = vmatprep.subr.mxu0 0.0
    %289 = vmatpush1.msra.mxu0 0.0
    %290 = vmatprep.subr.mxu0 0.0
    %291 = vmatpush1.msra.mxu0 0.0
    %292 = vmatprep.subr.mxu0 0.0
    %293 = vmatpush1.msra.mxu0 0.0
    %294 = vmatprep.subr.mxu0 0.0
    %295 = vmatpush1.msra.mxu0 0.0
    %296 = vmatprep.subr.mxu0 0.0
    %297 = vmatpush1.msra.mxu0 0.0
    %298 = vmatprep.subr.mxu0 0.0
    %299 = vmatpush1.msra.mxu0 0.0
    %300 = vmatprep.subr.mxu0 0.0
    %301 = vmatpush1.msra.mxu0 0.0
    %302 = vmatprep.subr.mxu0 0.0
    %303 = vmatpush1.msra.mxu0 0.0
    %304 = vmatprep.subr.mxu0 0.0
    %305 = vmatpush1.msra.mxu0 0.0
    %306 = vmatprep.subr.mxu0 0.0
    %307 = vmatpush1.msra.mxu0 0.0
    %308 = vmatprep.subr.mxu0 0.0
    %309 = vmatpush1.msra.mxu0 0.0
    %310 = vmatprep.subr.mxu0 0.0
    %311 = vmatpush1.msra.mxu0 0.0
    %312 = vmatprep.subr.mxu0 0.0
    %313 = vmatpush1.msra.mxu0 %v180
    %314 = vmatprep.subr.mxu0 0.0
    %315 = vmatpush1.msra.mxu0 %v179
    %316 = vmatprep.subr.mxu0 0.0
    %317 = vmatpush1.msra.mxu0 %v178
    %318 = vmatprep.subr.mxu0 0.0
    %319 = vmatpush1.msra.mxu0 %v177
    %320 = vmatprep.subr.mxu0 0.0
    %321 = vmatpush2.msra.mxu0 0.0
    %322 = vmatprep.subr.mxu0 0.0
    %323 = vmatpush2.msra.mxu0 0.0
    %324 = vmatprep.subr.mxu0 0.0
    %325 = vmatpush2.msra.mxu0 0.0
    %326 = vmatprep.subr.mxu0 0.0
    %327 = vmatpush2.msra.mxu0 0.0
    %328 = vmatprep.subr.mxu0 0.0
    %329 = vmatpush2.msra.mxu0 0.0
    %330 = vmatprep.subr.mxu0 0.0
    %331 = vmatpush2.msra.mxu0 0.0
    %332 = vmatprep.subr.mxu0 0.0
    %333 = vmatpush2.msra.mxu0 0.0
    %334 = vmatprep.subr.mxu0 0.0
    %335 = vmatpush2.msra.mxu0 0.0
    %336 = vmatprep.subr.mxu0 0.0
    %337 = vmatpush2.msra.mxu0 0.0
    %338 = vmatprep.subr.mxu0 0.0
    %339 = vmatpush2.msra.mxu0 0.0
    %340 = vmatprep.subr.mxu0 0.0
    %341 = vmatpush2.msra.mxu0 0.0
    %342 = vmatprep.subr.mxu0 0.0
    %343 = vmatpush2.msra.mxu0 0.0
    %344 = vmatprep.subr.mxu0 0.0
    %345 = vmatpush2.msra.mxu0 0.0
    %346 = vmatprep.subr.mxu0 0.0
    %347 = vmatpush2.msra.mxu0 0.0
    %348 = vmatprep.subr.mxu0 0.0
    %349 = vmatpush2.msra.mxu0 0.0
    %350 = vmatprep.subr.mxu0 0.0
    %351 = vmatpush2.msra.mxu0 0.0
    %352 = vmatprep.mubr.f32.mxu0 0.0
    %353 = vmatmul.mubr.f32.gmra.mxu0 %v190
    %v354 = vpop.f32.mrf.mxu0
    %v355 = vadd.f32 %v287, %v354
    %v356 = vpop.f32.mrf.mxu0
    %357 = vmatprep.mubr.f32.mxu0 0.0
    %358 = vmatmul.mubr.f32.gmra.mxu0 %v193
    %v359 = vpop.f32.mrf.mxu0
    %v360 = vadd.f32 %v287, %v359
    %v361 = vpop.f32.mrf.mxu0
    %362 = vdwg.mxu0
    %v363 = vmul.f32 %v282, %v355
    %v364 = vmul.f32 %v283, %v360
    %v365 = vlaneseq
    %v366 = vshrl.u32 %v365, 7
    %v367 = vsub.s32 4, %v366
    %v368 = vrot.slane %v160, %v367
    %v370 = vsel %vm73, %v363, 0
    %v373 = vsel %vm73, %v364, 0
    %375 = vmatprep.subr.mxu0 0.0
    %376 = vmatpush1.msra.mxu0 0.0
    %377 = vmatprep.subr.mxu0 0.0
    %378 = vmatpush1.msra.mxu0 0.0
    %379 = vmatprep.subr.mxu0 0.0
    %380 = vmatpush1.msra.mxu0 0.0
    %381 = vmatprep.subr.mxu0 0.0
    %382 = vmatpush1.msra.mxu0 0.0
    %383 = vmatprep.subr.mxu0 0.0
    %384 = vmatpush1.msra.mxu0 0.0
    %385 = vmatprep.subr.mxu0 0.0
    %386 = vmatpush1.msra.mxu0 0.0
    %387 = vmatprep.subr.mxu0 0.0
    %388 = vmatpush1.msra.mxu0 0.0
    %389 = vmatprep.subr.mxu0 0.0
    %390 = vmatpush1.msra.mxu0 0.0
    %391 = vmatprep.subr.mxu0 0.0
    %392 = vmatpush1.msra.mxu0 0.0
    %393 = vmatprep.subr.mxu0 0.0
    %394 = vmatpush1.msra.mxu0 0.0
    %395 = vmatprep.subr.mxu0 0.0
    %396 = vmatpush1.msra.mxu0 0.0
    %397 = vmatprep.subr.mxu0 0.0
    %398 = vmatpush1.msra.mxu0 0.0
    %399 = vmatprep.subr.mxu0 0.0
    %400 = vmatpush1.msra.mxu0 %v184
    %401 = vmatprep.subr.mxu0 0.0
    %402 = vmatpush1.msra.mxu0 %v183
    %403 = vmatprep.subr.mxu0 0.0
    %404 = vmatpush1.msra.mxu0 %v182
    %405 = vmatprep.subr.mxu0 0.0
    %406 = vmatpush1.msra.mxu0 %v181
    %407 = vmatprep.subr.mxu0 0.0
    %408 = vmatpush2.msra.mxu0 0.0
    %409 = vmatprep.subr.mxu0 0.0
    %410 = vmatpush2.msra.mxu0 0.0
    %411 = vmatprep.subr.mxu0 0.0
    %412 = vmatpush2.msra.mxu0 0.0
    %413 = vmatprep.subr.mxu0 0.0
    %414 = vmatpush2.msra.mxu0 0.0
    %415 = vmatprep.subr.mxu0 0.0
    %416 = vmatpush2.msra.mxu0 0.0
    %417 = vmatprep.subr.mxu0 0.0
    %418 = vmatpush2.msra.mxu0 0.0
    %419 = vmatprep.subr.mxu0 0.0
    %420 = vmatpush2.msra.mxu0 0.0
    %421 = vmatprep.subr.mxu0 0.0
    %422 = vmatpush2.msra.mxu0 0.0
    %423 = vmatprep.subr.mxu0 0.0
    %424 = vmatpush2.msra.mxu0 0.0
    %425 = vmatprep.subr.mxu0 0.0
    %426 = vmatpush2.msra.mxu0 0.0
    %427 = vmatprep.subr.mxu0 0.0
    %428 = vmatpush2.msra.mxu0 0.0
    %429 = vmatprep.subr.mxu0 0.0
    %430 = vmatpush2.msra.mxu0 0.0
    %431 = vmatprep.subr.mxu0 0.0
    %432 = vmatpush2.msra.mxu0 0.0
    %433 = vmatprep.subr.mxu0 0.0
    %434 = vmatpush2.msra.mxu0 0.0
    %435 = vmatprep.subr.mxu0 0.0
    %436 = vmatpush2.msra.mxu0 0.0
    %437 = vmatprep.subr.mxu0 0.0
    %438 = vmatpush2.msra.mxu0 0.0
    %439 = vmatprep.mubr.f32.mxu0 0.0
    %440 = vmatmul.mubr.f32.gmra.mxu0 %v370
    %v441 = vpop.f32.mrf.mxu0
    %v442 = vadd.f32 %v368, %v441
    %v443 = vpop.f32.mrf.mxu0
    %444 = vmatprep.mubr.f32.mxu0 0.0
    %445 = vmatmul.mubr.f32.gmra.mxu0 %v373
    %v446 = vpop.f32.mrf.mxu0
    %v447 = vadd.f32 %v368, %v446
    %v448 = vpop.f32.mrf.mxu0
    %449 = vdwg.mxu0
    %v450 = vadd.f32 %v442, %v131
    %v451 = vadd.f32 %v447, %v132
    %452 = vst.msk [vmem:[#allocation10] sm:$0xff] %vm73, %v450
    %453 = vst.msk [vmem:[#allocation10 + $0x8] sm:$0xff] %vm73, %v451
    // Predicated region
    $region34: #{tpu_custom_call.1} parent=1 // pred_check
      _
    $region35: #{tpu_custom_call.1} parent=1 // pred_check_branch
      %455 = sbr.rel (0) target = $region37
    $region36: #{tpu_custom_call.1} parent=1 // pred_region
      %s457 = ssub.s32 256, 256
      %458 = vsyncadd [#allocation4], %s457
      %s459 = sshll.u32 [#allocation10], 4
      %s460 = int_to_ptr.vmem [resolvable:$true] %s459
      %465 = dma.vmem_to_hbm [thread:$0]  %s460, 256, %s4, [#allocation4], 128, 128, 8
    $region37: #{tpu_custom_call.1} parent=1 // pred_fallthru
      _
    // Predicated region
    $region38: #{tpu_custom_call.1} parent=1 // pred_check
      _
    $region39: #{tpu_custom_call.1} parent=1 // pred_check_branch
      %467 = sbr.rel (0) target = $region41
    $region40: #{tpu_custom_call.1} parent=1 // pred_region
      %468 = dma.done [#allocation4], 256
    $region41: #{tpu_custom_call.1} parent=1 // pred_fallthru
      _
    %469 = vsyncpa [#allocation3], 1
    %470 = vsyncpa [#allocation6], 1
    %471 = vsyncpa [#allocation9], 1
    %472 = vsyncpa [#allocation4], 1

</llo_original>
